<compile_context>
chip_gen: v7x
topology: tpu7x:2x2x1
jax: 0.10.0
libtpu: 0.0.40
codegen_flags: <defaults>
</compile_context>

<pallas_src>
import jax
import jax.numpy as jnp
import numpy as np
from jax.experimental import pallas as pl
from jax.experimental.pallas import tpu as pltpu


def _make_textcnn_kernel(max_k, compute_dtype):
    """Fused conv(all kernel sizes) + bias + ReLU + masked max-over-time."""

    def kernel(x_ref, w_ref, b_ref, mask_ref, o_ref):
        # x_ref    : (Bt, L, E)        batch tile of the input
        # w_ref    : (max_k*E, F_pad)  packed weights (branch i -> cols [i*F,(i+1)*F))
        # b_ref    : (1, F_pad)        packed biases (zeros in padding columns)
        # mask_ref : (L, F_pad)        0/1 valid-time mask (1 iff t < L - k_i + 1)
        # o_ref    : (Bt, F_pad)       pooled output (lane-dense, padded to 128)
        Bt, L, E = x_ref.shape
        F_pad = o_ref.shape[-1]

        x = x_ref[...].astype(jnp.float32)  # (Bt, L, E)

        # im2col along the lane axis: tap j's columns at time t hold x[t + j],
        # zero-filled past the end of the sequence.  Taps j >= k_i only ever
        # multiply zero weight columns for branch i.
        taps = [x]
        for j in range(1, max_k):
            taps.append(jnp.concatenate(
                [x[:, j:, :], jnp.zeros((Bt, j, E), jnp.float32)], axis=1))
        xc = jnp.concatenate(taps, axis=-1).reshape(Bt * L, max_k * E)

        # One MXU push covers every kernel size / tap / filter: K=max_k*E,
        # N=F_pad.  bf16 operands, f32 accumulation.
        y = jnp.dot(xc.astype(compute_dtype), w_ref[...],
                    preferred_element_type=jnp.float32)          # (Bt*L, F_pad)
        y = y.reshape(Bt, L, F_pad) + b_ref[...][None, :, :]     # bias (f32)
        y = jnp.maximum(y, 0.0)                                  # ReLU

        # Valid-time mask applied AFTER ReLU: every candidate is >= 0, so
        # zeroing out-of-range positions can never exceed the true per-branch
        # max.  Do NOT move this before the activation (post-bias values may
        # be negative and 0 would then leak into the max-pool).
        y = y * mask_ref[...][None, :, :]
        o_ref[...] = jnp.max(y, axis=1)                          # (Bt, F_pad)

    return kernel


def _pick_batch_tile(batch):
    """Generation-aware batch tile.

    v5e / v6e have a single TensorCore, so the grid is a serial loop: one fat
    step (bt=16 -> M = bt*L = 256, a native 256-wide MXU pass) halves the fixed
    ~0.35us/step pipeline overhead.  v7x has two TensorCores that the
    "parallel" grid axis is sharded across, so keep the grid >= 2 steps there.
    (VMEM is a non-issue at these sizes on all generations.)
    """
    kind = ""
    try:
        kind = jax.devices()[0].device_kind.lower()
    except Exception:
        pass
    multi_tc = "7" in kind  # TPU v7x: 2 TensorCores per chip
    candidates = [bt for bt in (16, 8) if batch % bt == 0]
    if not candidates:
        return batch  # block spans the full batch dim (always a legal block)
    if multi_tc:
        for bt in candidates:
            if batch // bt >= 2:
                return bt
        return candidates[-1]
    return candidates[0]


class TextCNNPallas:
    """TextCNN forward as one fused Pallas TPU kernel.

    Accepts nn.Conv1d-layout parameters: weight (F, E, k), bias (F,).
    Packing (weights / biases / valid-time mask) happens once at __init__
    (numpy, host side); __call__ runs a single jitted pallas_call.
    """

    def __init__(self, weights, biases, kernel_sizes, seq_len, *,
                 f_pad=128, batch_tile=None, compute_dtype=jnp.bfloat16):
        self.kernel_sizes = list(kernel_sizes)
        self.max_k = max(self.kernel_sizes)
        self.seq_len = int(seq_len)
        F, E, _ = np.asarray(weights[0]).shape  # nn.Conv1d layout (F, E, k)
        self.num_filters = int(F)
        self.embedding_dim = int(E)
        self.F_total = self.num_filters * len(self.kernel_sizes)
        self.f_pad = int(f_pad)
        self.batch_tile = batch_tile
        self.compute_dtype = compute_dtype

        assert self.F_total <= self.f_pad, "padded filter width too small"
        assert self.seq_len >= self.max_k, "sequence shorter than largest conv kernel"
        assert self.f_pad % 128 == 0, "output padding must be lane-aligned"

        # ---- one-time host-side packing (out of the forward path) ----
        # Branch i, tap j occupies rows [j*E:(j+1)*E], cols [i*F:(i+1)*F);
        # taps j >= k_i and columns >= F_total stay zero.
        w_all = np.zeros((self.max_k * E, self.f_pad), np.float32)
        b_all = np.zeros((1, self.f_pad), np.float32)
        mask = np.zeros((self.seq_len, self.f_pad), np.float32)
        for i, (w, b, k) in enumerate(zip(weights, biases, self.kernel_sizes)):
            w = np.asarray(w, np.float32)
            assert w.shape == (F, E, k), "expected nn.Conv1d weight layout (F, E, k)"
            # row j*E + e, col i*F + f  <-  w[f, e, j]
            w_all[: k * E, i * F:(i + 1) * F] = (
                np.transpose(w, (2, 1, 0)).reshape(k * E, F))
            b_all[0, i * F:(i + 1) * F] = np.asarray(b, np.float32)
            mask[: self.seq_len - k + 1, i * F:(i + 1) * F] = 1.0  # valid conv positions

        self._w_all = jnp.asarray(w_all, compute_dtype)  # bf16 weights -> bf16 MXU
        self._b_all = jnp.asarray(b_all, jnp.float32)
        self._mask = jnp.asarray(mask, jnp.float32)

        self._kernel = _make_textcnn_kernel(self.max_k, compute_dtype)
        self._forward = jax.jit(self._forward_impl)

    def __call__(self, x):
        return self._forward(x, self._w_all, self._b_all, self._mask)

    def _forward_impl(self, x, w_all, b_all, mask):
        B, L, E = x.shape
        assert L == self.seq_len and E == self.embedding_dim
        bt = self.batch_tile if self.batch_tile is not None else _pick_batch_tile(B)
        assert B % bt == 0, "batch must divide by the batch tile"
        f_pad, max_k = self.f_pad, self.max_k

        out_pad = pl.pallas_call(
            self._kernel,
            out_shape=jax.ShapeDtypeStruct((B, f_pad), jnp.float32),
            grid_spec=pltpu.PrefetchScalarGridSpec(
                num_scalar_prefetch=0,
                grid=(B // bt,),
                in_specs=[
                    pl.BlockSpec((bt, L, E), lambda bi: (bi, 0, 0)),      # batch tile of x
                    pl.BlockSpec((max_k * E, f_pad), lambda bi: (0, 0)),  # packed weights (grid-invariant)
                    pl.BlockSpec((1, f_pad), lambda bi: (0, 0)),          # packed bias (grid-invariant)
                    pl.BlockSpec((L, f_pad), lambda bi: (0, 0)),          # valid-time mask (grid-invariant)
                ],
                out_specs=pl.BlockSpec((bt, f_pad), lambda bi: (bi, 0)),  # lane-dense padded output
            ),
            compiler_params=pltpu.CompilerParams(
                dimension_semantics=("parallel",),
            ),
        )(x, w_all, b_all, mask)

        # Padded columns (>= F_total) hold zeros; the slice folds under jit.
        return out_pad[:, :self.F_total]


def textcnn_forward_ref(x, weights, biases, kernel_sizes):
    """Pure-JAX reference matching the PyTorch module semantics (f32)."""
    B, L, E = x.shape
    outs = []
    for w, b, k in zip(weights, biases, kernel_sizes):
        F = w.shape[0]
        L_out = L - k + 1
        acc = jnp.zeros((B, L_out, F), jnp.float32)
        for j in range(k):
            acc = acc + jnp.einsum("ble,fe->blf", x[:, j:j + L_out, :], w[:, :, j])
        acc = jnp.maximum(acc + b[None, None, :], 0.0)
        outs.append(jnp.max(acc, axis=1))
    return jnp.concatenate(outs, axis=1)


if __name__ == "__main__":
    # Small shapes consistent with the module.
    B = 16               # batch
    L = 16               # sequence length
    E = 32               # embedding_dim
    F = 8                # num_filters
    kernel_sizes = [3, 4, 5]

    key = jax.random.PRNGKey(0)
    kx, *kparams = jax.random.split(key, 1 + 2 * len(kernel_sizes))

    # Input in (B, seq_len, embedding_dim) layout, as given to TextCNN.forward.
    x = jax.random.normal(kx, (B, L, E), dtype=jnp.float32)

    # Parameters with nn.Conv1d(E, F, k) shapes: weight (F, E, k), bias (F,).
    weights, biases = [], []
    for i, k in enumerate(kernel_sizes):
        kw, kb = kparams[2 * i], kparams[2 * i + 1]
        weights.append(jax.random.normal(kw, (F, E, k), dtype=jnp.float32) * 0.1)
        biases.append(jax.random.normal(kb, (F,), dtype=jnp.float32) * 0.1)

    model = TextCNNPallas(weights, biases, kernel_sizes, seq_len=L)
    out = jax.block_until_ready(model(x))

    ref = textcnn_forward_ref(x, weights, biases, kernel_sizes)
    # bf16 MXU operands with f32 accumulation -> loosened tolerance.
    np.testing.assert_allclose(np.asarray(out), np.asarray(ref),
                               rtol=2e-2, atol=2e-2)

    assert out.shape == (B, F * len(kernel_sizes))
    print("KERNEL_OK")
</pallas_src>

<mosaic_0001>
module attributes {stable_mosaic.version = 11 : i64} {
  func.func @kernel(%arg0: i32, %arg1: memref<16x16x32xf32, #tpu.memory_space<vmem>>, %arg2: memref<160x128xbf16, #tpu.memory_space<vmem>>, %arg3: memref<1x128xf32, #tpu.memory_space<vmem>>, %arg4: memref<16x128xf32, #tpu.memory_space<vmem>>, %arg5: memref<16x128xf32, #tpu.memory_space<vmem>>) attributes {dimension_semantics = [#tpu.dimension_semantics<parallel>], iteration_bounds = array<i64: 1>, scalar_prefetch = 0 : i64, scratch_operands = 0 : i64, tpu.core_type = #tpu.core_type<tc>, window_params = [{transform_indices = @transform_0, window_bounds = array<i64: 16, 16, 32>}, {pipeline_mode = #tpu.pipeline_mode<synchronous>, transform_indices = @transform_1, window_bounds = array<i64: 160, 128>}, {pipeline_mode = #tpu.pipeline_mode<synchronous>, transform_indices = @transform_2, window_bounds = array<i64: 1, 128>}, {pipeline_mode = #tpu.pipeline_mode<synchronous>, transform_indices = @transform_3, window_bounds = array<i64: 16, 128>}, {transform_indices = @transform_4, window_bounds = array<i64: 16, 128>}]} {
    %c0 = arith.constant 0 : index
    %c0_0 = arith.constant 0 : index
    %c0_1 = arith.constant 0 : index
    %0 = vector.load %arg1[%c0, %c0_0, %c0_1] : memref<16x16x32xf32, #tpu.memory_space<vmem>>, vector<16x16x32xf32>
    %1 = vector.extract_strided_slice %0 {offsets = [0, 1, 0], sizes = [16, 15, 32], strides = [1, 1, 1]} : vector<16x16x32xf32> to vector<16x15x32xf32>
    %cst = arith.constant 0.000000e+00 : f32
    %2 = vector.broadcast %cst : f32 to vector<16x1x32xf32>
    %3 = tpu.concatenate %1, %2 in 1 : vector<16x15x32xf32>, vector<16x1x32xf32> -> vector<16x16x32xf32>
    %4 = vector.extract_strided_slice %0 {offsets = [0, 2, 0], sizes = [16, 14, 32], strides = [1, 1, 1]} : vector<16x16x32xf32> to vector<16x14x32xf32>
    %cst_2 = arith.constant 0.000000e+00 : f32
    %5 = vector.broadcast %cst_2 : f32 to vector<16x2x32xf32>
    %6 = tpu.concatenate %4, %5 in 1 : vector<16x14x32xf32>, vector<16x2x32xf32> -> vector<16x16x32xf32>
    %7 = vector.extract_strided_slice %0 {offsets = [0, 3, 0], sizes = [16, 13, 32], strides = [1, 1, 1]} : vector<16x16x32xf32> to vector<16x13x32xf32>
    %cst_3 = arith.constant 0.000000e+00 : f32
    %8 = vector.broadcast %cst_3 : f32 to vector<16x3x32xf32>
    %9 = tpu.concatenate %7, %8 in 1 : vector<16x13x32xf32>, vector<16x3x32xf32> -> vector<16x16x32xf32>
    %10 = vector.extract_strided_slice %0 {offsets = [0, 4, 0], sizes = [16, 12, 32], strides = [1, 1, 1]} : vector<16x16x32xf32> to vector<16x12x32xf32>
    %cst_4 = arith.constant 0.000000e+00 : f32
    %11 = vector.broadcast %cst_4 : f32 to vector<16x4x32xf32>
    %12 = tpu.concatenate %10, %11 in 1 : vector<16x12x32xf32>, vector<16x4x32xf32> -> vector<16x16x32xf32>
    %13 = tpu.concatenate %0, %3, %6, %9, %12 in 2 : vector<16x16x32xf32>, vector<16x16x32xf32>, vector<16x16x32xf32>, vector<16x16x32xf32>, vector<16x16x32xf32> -> vector<16x16x160xf32>
    %14 = vector.shape_cast %13 : vector<16x16x160xf32> to vector<256x160xf32>
    %15 = arith.truncf %14 : vector<256x160xf32> to vector<256x160xbf16>
    %c0_5 = arith.constant 0 : index
    %c0_6 = arith.constant 0 : index
    %16 = vector.load %arg2[%c0_5, %c0_6] : memref<160x128xbf16, #tpu.memory_space<vmem>>, vector<160x128xbf16>
    %cst_7 = arith.constant dense<0.000000e+00> : vector<256x128xf32>
    %17 = tpu.matmul %15, %16, %cst_7 {dimension_numbers = #tpu.dot_dimension_numbers<[1], [0], [0], [1], [0, 0, 1, 1], [], []>} : vector<256x160xbf16>, vector<160x128xbf16>, vector<256x128xf32> -> vector<256x128xf32>
    %18 = vector.shape_cast %17 : vector<256x128xf32> to vector<16x16x128xf32>
    %c0_8 = arith.constant 0 : index
    %c0_9 = arith.constant 0 : index
    %19 = vector.load %arg3[%c0_8, %c0_9] : memref<1x128xf32, #tpu.memory_space<vmem>>, vector<1x128xf32>
    %20 = vector.shape_cast %19 : vector<1x128xf32> to vector<1x1x128xf32>
    %21 = vector.broadcast %20 : vector<1x1x128xf32> to vector<16x16x128xf32>
    %22 = arith.addf %18, %21 : vector<16x16x128xf32>
    %cst_10 = arith.constant 0.000000e+00 : f32
    %23 = vector.broadcast %cst_10 : f32 to vector<16x16x128xf32>
    %24 = arith.maximumf %22, %23 : vector<16x16x128xf32>
    %c0_11 = arith.constant 0 : index
    %c0_12 = arith.constant 0 : index
    %25 = vector.load %arg4[%c0_11, %c0_12] : memref<16x128xf32, #tpu.memory_space<vmem>>, vector<16x128xf32>
    %26 = vector.shape_cast %25 : vector<16x128xf32> to vector<1x16x128xf32>
    %27 = vector.broadcast %26 : vector<1x16x128xf32> to vector<16x16x128xf32>
    %28 = arith.mulf %24, %27 : vector<16x16x128xf32>
    %cst_13 = arith.constant dense<0xFF800000> : vector<16x128xf32>
    %29 = vector.multi_reduction <maximumf>, %28, %cst_13 [1] : vector<16x16x128xf32> to vector<16x128xf32>
    %c0_14 = arith.constant 0 : index
    %c0_15 = arith.constant 0 : index
    %30 = vector.load %arg5[%c0_14, %c0_15] : memref<16x128xf32, #tpu.memory_space<vmem>>, vector<16x128xf32>
    tpu.vector_store %arg5[%c0_14, %c0_15], %29 {strides = array<i32>} : memref<16x128xf32, #tpu.memory_space<vmem>>, vector<16x128xf32>,
    return
  }
  func.func @transform_0(%arg0: i32) -> (i32, i32, i32) {
    %c0_i32 = arith.constant 0 : i32
    %c0_i32_0 = arith.constant 0 : i32
    %c0_i32_1 = arith.constant 0 : i32
    return %arg0, %c0_i32, %c0_i32_0 : i32, i32, i32
  }
  func.func @transform_1(%arg0: i32) -> (i32, i32) {
    %c0_i32 = arith.constant 0 : i32
    %c0_i32_0 = arith.constant 0 : i32
    %c0_i32_1 = arith.constant 0 : i32
    return %c0_i32, %c0_i32_0 : i32, i32
  }
  func.func @transform_2(%arg0: i32) -> (i32, i32) {
    %c0_i32 = arith.constant 0 : i32
    %c0_i32_0 = arith.constant 0 : i32
    %c0_i32_1 = arith.constant 0 : i32
    return %c0_i32, %c0_i32_0 : i32, i32
  }
  func.func @transform_3(%arg0: i32) -> (i32, i32) {
    %c0_i32 = arith.constant 0 : i32
    %c0_i32_0 = arith.constant 0 : i32
    %c0_i32_1 = arith.constant 0 : i32
    return %c0_i32, %c0_i32_0 : i32, i32
  }
  func.func @transform_4(%arg0: i32) -> (i32, i32) {
    %c0_i32 = arith.constant 0 : i32
    %c0_i32_0 = arith.constant 0 : i32
    return %arg0, %c0_i32 : i32, i32
  }
}

</mosaic_0001>

<llo_original>
// kernel: _forward_impl.1
$region0: #{_forward_impl.1}
  #allocation0 [shape = 'u32[]', space=smem, size = 0x4, offset = 0x4, fixed_abs, tag = 'smem constant byte address 0x4 - core index']
  #allocation1 [shape = 'u32[144,128]{1,0:T(1,128)}', space=vmem, size = 0x12000, scoped, tag = 'internal scratch']
  %s0 = inlined_call_operand.hbm [shape: f32[16,16,32], index: 0, kind: input, shape index: {}]
  %s1 = inlined_call_operand.hbm [shape: bf16[160,128], index: 1, kind: input, shape index: {}]
  %s2 = inlined_call_operand.vmem [shape: f32[1,128], index: 2, kind: input, shape index: {}]
  %s3 = inlined_call_operand.hbm [shape: f32[16,128], index: 3, kind: input, shape index: {}]
  %s4 = inlined_call_operand.hbm [shape: f32[16,128], index: 4, kind: output, shape index: {}]
  %s5 = sld [smem:[#allocation0]]
  $region38: #{_forward_impl.1} parent=0
    _
  %s7 = ssub.s32 1, %s5
  %s8 = scalar_select 0, %s7, %s5
  $region1: #{_forward_impl.1} parent=0
    #allocation2 [shape = 'u8[131072]{0}', space=vmem, size = 0x20000, scoped, tag = 'input window, operand 0, single buffered']
    #allocation3 [shape = 's32[1]{0}', space=sflag, size = 0x4, scoped, tag = 'scoped memory for _forward_impl.1']
    #allocation4 [shape = 's32[1]{0}', space=sflag, size = 0x4, scoped, tag = 'scoped memory for _forward_impl.1']
    #allocation5 [shape = 'u8[40960]{0}', space=vmem, size = 0xa000, scoped, tag = 'input window, operand 1, single buffered']
    #allocation6 [shape = 's32[1]{0}', space=sflag, size = 0x4, scoped, tag = 'scoped memory for _forward_impl.1']
    #allocation7 [shape = 'u8[8192]{0}', space=vmem, size = 0x2000, scoped, tag = 'input window, operand 3, single buffered']
    #allocation8 [shape = 'u8[8192]{0}', space=vmem, size = 0x2000, scoped, tag = 'output window, operand 0, single buffered']
    %9 = vsyncpa [#allocation3], 0
    %10 = vsyncpa [#allocation6], 0
    %11 = vsyncpa [#allocation4], 0
    // Predicated region
    $region2: #{_forward_impl.1} parent=1 // pred_check
      _
    $region3: #{_forward_impl.1} parent=1 // pred_check_branch
      %13 = sbr.rel (0) target = $region5
    $region4: #{_forward_impl.1} parent=1 // pred_region
      %s15 = ssub.s32 4096, 4096
      %16 = vsyncadd [#allocation3], %s15
      %s17 = sshll.u32 [#allocation2], 4
      %s18 = int_to_ptr.vmem [resolvable:$true] %s17
      %23 = dma.hbm_to_vmem [thread:$0]  %s0, 4096, %s18, [#allocation3], 128, 128, 8
    $region5: #{_forward_impl.1} parent=1 // pred_fallthru
      _
    // Predicated region
    $region6: #{_forward_impl.1} parent=1 // pred_check
      _
    $region7: #{_forward_impl.1} parent=1 // pred_check_branch
      %25 = sbr.rel (0) target = $region9
    $region8: #{_forward_impl.1} parent=1 // pred_region
      %s27 = ssub.s32 1280, 1280
      %28 = vsyncadd [#allocation6], %s27
      %s29 = sshll.u32 [#allocation5], 4
      %s30 = int_to_ptr.vmem [resolvable:$true] %s29
      %35 = dma.hbm_to_vmem [thread:$0]  %s1, 1280, %s30, [#allocation6], 64, 64, 4
    $region9: #{_forward_impl.1} parent=1 // pred_fallthru
      _
    // Predicated region
    $region10: #{_forward_impl.1} parent=1 // pred_check
      _
    $region11: #{_forward_impl.1} parent=1 // pred_check_branch
      %37 = sbr.rel (0) target = $region13
    $region12: #{_forward_impl.1} parent=1 // pred_region
      _
    $region13: #{_forward_impl.1} parent=1 // pred_fallthru
      _
    // Predicated region
    $region14: #{_forward_impl.1} parent=1 // pred_check
      _
    $region15: #{_forward_impl.1} parent=1 // pred_check_branch
      %39 = sbr.rel (0) target = $region17
    $region16: #{_forward_impl.1} parent=1 // pred_region
      %s41 = ssub.s32 256, 256
      %42 = vsyncadd [#allocation6], %s41
      %s43 = sshll.u32 [#allocation7], 4
      %s44 = int_to_ptr.vmem [resolvable:$true] %s43
      %49 = dma.hbm_to_vmem [thread:$0]  %s3, 256, %s44, [#allocation6], 128, 128, 8
    $region17: #{_forward_impl.1} parent=1 // pred_fallthru
      _
    // Predicated region
    $region18: #{_forward_impl.1} parent=1 // pred_check
      _
    $region19: #{_forward_impl.1} parent=1 // pred_check_branch
      %51 = sbr.rel (0) target = $region21
    $region20: #{_forward_impl.1} parent=1 // pred_region
      %52 = dma.done [#allocation3], 4096
    $region21: #{_forward_impl.1} parent=1 // pred_fallthru
      _
    // Predicated region
    $region22: #{_forward_impl.1} parent=1 // pred_check
      _
    $region23: #{_forward_impl.1} parent=1 // pred_check_branch
      %54 = sbr.rel (0) target = $region25
    $region24: #{_forward_impl.1} parent=1 // pred_region
      %55 = dma.done [#allocation6], 1280
    $region25: #{_forward_impl.1} parent=1 // pred_fallthru
      _
    // Predicated region
    $region26: #{_forward_impl.1} parent=1 // pred_check
      _
    $region27: #{_forward_impl.1} parent=1 // pred_check_branch
      %57 = sbr.rel (0) target = $region29
    $region28: #{_forward_impl.1} parent=1 // pred_region
      %58 = dma.done [#allocation6], 256
    $region29: #{_forward_impl.1} parent=1 // pred_fallthru
      _
    %v60 = vld [vmem:[#allocation2] sm:$0xff]
    %v61 = vld [vmem:[#allocation2 + $0x8] sm:$0xff]
    %v62 = vld [vmem:[#allocation2 + $0x10] sm:$0xff]
    %v63 = vld [vmem:[#allocation2 + $0x18] sm:$0xff]
    %v64 = vld [vmem:[#allocation2 + $0x20] sm:$0xff]
    %v65 = vld [vmem:[#allocation2 + $0x28] sm:$0xff]
    %v66 = vld [vmem:[#allocation2 + $0x30] sm:$0xff]
    %v67 = vld [vmem:[#allocation2 + $0x38] sm:$0xff]
    %v68 = vld [vmem:[#allocation2 + $0x40] sm:$0xff]
    %v69 = vld [vmem:[#allocation2 + $0x48] sm:$0xff]
    %v70 = vld [vmem:[#allocation2 + $0x50] sm:$0xff]
    %v71 = vld [vmem:[#allocation2 + $0x58] sm:$0xff]
    %v72 = vld [vmem:[#allocation2 + $0x60] sm:$0xff]
    %v73 = vld [vmem:[#allocation2 + $0x68] sm:$0xff]
    %v74 = vld [vmem:[#allocation2 + $0x70] sm:$0xff]
    %v75 = vld [vmem:[#allocation2 + $0x78] sm:$0xff]
    %v76 = vld [vmem:[#allocation2 + $0x80] sm:$0xff]
    %v77 = vld [vmem:[#allocation2 + $0x88] sm:$0xff]
    %v78 = vld [vmem:[#allocation2 + $0x90] sm:$0xff]
    %v79 = vld [vmem:[#allocation2 + $0x98] sm:$0xff]
    %v80 = vld [vmem:[#allocation2 + $0xa0] sm:$0xff]
    %v81 = vld [vmem:[#allocation2 + $0xa8] sm:$0xff]
    %v82 = vld [vmem:[#allocation2 + $0xb0] sm:$0xff]
    %v83 = vld [vmem:[#allocation2 + $0xb8] sm:$0xff]
    %v84 = vld [vmem:[#allocation2 + $0xc0] sm:$0xff]
    %v85 = vld [vmem:[#allocation2 + $0xc8] sm:$0xff]
    %v86 = vld [vmem:[#allocation2 + $0xd0] sm:$0xff]
    %v87 = vld [vmem:[#allocation2 + $0xd8] sm:$0xff]
    %v88 = vld [vmem:[#allocation2 + $0xe0] sm:$0xff]
    %v89 = vld [vmem:[#allocation2 + $0xe8] sm:$0xff]
    %v90 = vld [vmem:[#allocation2 + $0xf0] sm:$0xff]
    %v91 = vld [vmem:[#allocation2 + $0xf8] sm:$0xff]
    %vm124 = vcmask 1046528
    %v125 = vrot.slane %v60, 1
    %v126 = vrot.slane %v61, 1
    %v127 = vsel %vm124, %v125, %v126
    %v128 = vrot.slane %v62, 1
    %v129 = vrot.slane %v63, 1
    %v130 = vsel %vm124, %v128, %v129
    %v131 = vrot.slane %v64, 1
    %v132 = vrot.slane %v65, 1
    %v133 = vsel %vm124, %v131, %v132
    %v134 = vrot.slane %v66, 1
    %v135 = vrot.slane %v67, 1
    %v136 = vsel %vm124, %v134, %v135
    %v137 = vrot.slane %v68, 1
    %v138 = vrot.slane %v69, 1
    %v139 = vsel %vm124, %v137, %v138
    %v140 = vrot.slane %v70, 1
    %v141 = vrot.slane %v71, 1
    %v142 = vsel %vm124, %v140, %v141
    %v143 = vrot.slane %v72, 1
    %v144 = vrot.slane %v73, 1
    %v145 = vsel %vm124, %v143, %v144
    %v146 = vrot.slane %v74, 1
    %v147 = vrot.slane %v75, 1
    %v148 = vsel %vm124, %v146, %v147
    %v149 = vrot.slane %v76, 1
    %v150 = vrot.slane %v77, 1
    %v151 = vsel %vm124, %v149, %v150
    %v152 = vrot.slane %v78, 1
    %v153 = vrot.slane %v79, 1
    %v154 = vsel %vm124, %v152, %v153
    %v155 = vrot.slane %v80, 1
    %v156 = vrot.slane %v81, 1
    %v157 = vsel %vm124, %v155, %v156
    %v158 = vrot.slane %v82, 1
    %v159 = vrot.slane %v83, 1
    %v160 = vsel %vm124, %v158, %v159
    %v161 = vrot.slane %v84, 1
    %v162 = vrot.slane %v85, 1
    %v163 = vsel %vm124, %v161, %v162
    %v164 = vrot.slane %v86, 1
    %v165 = vrot.slane %v87, 1
    %v166 = vsel %vm124, %v164, %v165
    %v167 = vrot.slane %v88, 1
    %v168 = vrot.slane %v89, 1
    %v169 = vsel %vm124, %v167, %v168
    %v170 = vrot.slane %v90, 1
    %v171 = vrot.slane %v91, 1
    %v172 = vsel %vm124, %v170, %v171
    %v189 = vsel %vm124, %v126, 0.0
    %v190 = vsel %vm124, %v129, 0.0
    %v191 = vsel %vm124, %v132, 0.0
    %v192 = vsel %vm124, %v135, 0.0
    %v193 = vsel %vm124, %v138, 0.0
    %v194 = vsel %vm124, %v141, 0.0
    %v195 = vsel %vm124, %v144, 0.0
    %v196 = vsel %vm124, %v147, 0.0
    %v197 = vsel %vm124, %v150, 0.0
    %v198 = vsel %vm124, %v153, 0.0
    %v199 = vsel %vm124, %v156, 0.0
    %v200 = vsel %vm124, %v159, 0.0
    %v201 = vsel %vm124, %v162, 0.0
    %v202 = vsel %vm124, %v165, 0.0
    %v203 = vsel %vm124, %v168, 0.0
    %v204 = vsel %vm124, %v171, 0.0
    %vm205 = vcmask 1045504
    %v206 = vrot.slane %v60, 2
    %v207 = vrot.slane %v61, 2
    %v208 = vsel %vm205, %v206, %v207
    %v209 = vrot.slane %v62, 2
    %v210 = vrot.slane %v63, 2
    %v211 = vsel %vm205, %v209, %v210
    %v212 = vrot.slane %v64, 2
    %v213 = vrot.slane %v65, 2
    %v214 = vsel %vm205, %v212, %v213
    %v215 = vrot.slane %v66, 2
    %v216 = vrot.slane %v67, 2
    %v217 = vsel %vm205, %v215, %v216
    %v218 = vrot.slane %v68, 2
    %v219 = vrot.slane %v69, 2
    %v220 = vsel %vm205, %v218, %v219
    %v221 = vrot.slane %v70, 2
    %v222 = vrot.slane %v71, 2
    %v223 = vsel %vm205, %v221, %v222
    %v224 = vrot.slane %v72, 2
    %v225 = vrot.slane %v73, 2
    %v226 = vsel %vm205, %v224, %v225
    %v227 = vrot.slane %v74, 2
    %v228 = vrot.slane %v75, 2
    %v229 = vsel %vm205, %v227, %v228
    %v230 = vrot.slane %v76, 2
    %v231 = vrot.slane %v77, 2
    %v232 = vsel %vm205, %v230, %v231
    %v233 = vrot.slane %v78, 2
    %v234 = vrot.slane %v79, 2
    %v235 = vsel %vm205, %v233, %v234
    %v236 = vrot.slane %v80, 2
    %v237 = vrot.slane %v81, 2
    %v238 = vsel %vm205, %v236, %v237
    %v239 = vrot.slane %v82, 2
    %v240 = vrot.slane %v83, 2
    %v241 = vsel %vm205, %v239, %v240
    %v242 = vrot.slane %v84, 2
    %v243 = vrot.slane %v85, 2
    %v244 = vsel %vm205, %v242, %v243
    %v245 = vrot.slane %v86, 2
    %v246 = vrot.slane %v87, 2
    %v247 = vsel %vm205, %v245, %v246
    %v248 = vrot.slane %v88, 2
    %v249 = vrot.slane %v89, 2
    %v250 = vsel %vm205, %v248, %v249
    %v251 = vrot.slane %v90, 2
    %v252 = vrot.slane %v91, 2
    %v253 = vsel %vm205, %v251, %v252
    %v270 = vsel %vm205, %v207, 0.0
    %v271 = vsel %vm205, %v210, 0.0
    %v272 = vsel %vm205, %v213, 0.0
    %v273 = vsel %vm205, %v216, 0.0
    %v274 = vsel %vm205, %v219, 0.0
    %v275 = vsel %vm205, %v222, 0.0
    %v276 = vsel %vm205, %v225, 0.0
    %v277 = vsel %vm205, %v228, 0.0
    %v278 = vsel %vm205, %v231, 0.0
    %v279 = vsel %vm205, %v234, 0.0
    %v280 = vsel %vm205, %v237, 0.0
    %v281 = vsel %vm205, %v240, 0.0
    %v282 = vsel %vm205, %v243, 0.0
    %v283 = vsel %vm205, %v246, 0.0
    %v284 = vsel %vm205, %v249, 0.0
    %v285 = vsel %vm205, %v252, 0.0
    %vm286 = vcmask 1044480
    %v287 = vrot.slane %v60, 3
    %v288 = vrot.slane %v61, 3
    %v289 = vsel %vm286, %v287, %v288
    %v290 = vrot.slane %v62, 3
    %v291 = vrot.slane %v63, 3
    %v292 = vsel %vm286, %v290, %v291
    %v293 = vrot.slane %v64, 3
    %v294 = vrot.slane %v65, 3
    %v295 = vsel %vm286, %v293, %v294
    %v296 = vrot.slane %v66, 3
    %v297 = vrot.slane %v67, 3
    %v298 = vsel %vm286, %v296, %v297
    %v299 = vrot.slane %v68, 3
    %v300 = vrot.slane %v69, 3
    %v301 = vsel %vm286, %v299, %v300
    %v302 = vrot.slane %v70, 3
    %v303 = vrot.slane %v71, 3
    %v304 = vsel %vm286, %v302, %v303
    %v305 = vrot.slane %v72, 3
    %v306 = vrot.slane %v73, 3
    %v307 = vsel %vm286, %v305, %v306
    %v308 = vrot.slane %v74, 3
    %v309 = vrot.slane %v75, 3
    %v310 = vsel %vm286, %v308, %v309
    %v311 = vrot.slane %v76, 3
    %v312 = vrot.slane %v77, 3
    %v313 = vsel %vm286, %v311, %v312
    %v314 = vrot.slane %v78, 3
    %v315 = vrot.slane %v79, 3
    %v316 = vsel %vm286, %v314, %v315
    %v317 = vrot.slane %v80, 3
    %v318 = vrot.slane %v81, 3
    %v319 = vsel %vm286, %v317, %v318
    %v320 = vrot.slane %v82, 3
    %v321 = vrot.slane %v83, 3
    %v322 = vsel %vm286, %v320, %v321
    %v323 = vrot.slane %v84, 3
    %v324 = vrot.slane %v85, 3
    %v325 = vsel %vm286, %v323, %v324
    %v326 = vrot.slane %v86, 3
    %v327 = vrot.slane %v87, 3
    %v328 = vsel %vm286, %v326, %v327
    %v329 = vrot.slane %v88, 3
    %v330 = vrot.slane %v89, 3
    %v331 = vsel %vm286, %v329, %v330
    %v332 = vrot.slane %v90, 3
    %v333 = vrot.slane %v91, 3
    %v334 = vsel %vm286, %v332, %v333
    %v351 = vsel %vm286, %v288, 0.0
    %v352 = vsel %vm286, %v291, 0.0
    %v353 = vsel %vm286, %v294, 0.0
    %v354 = vsel %vm286, %v297, 0.0
    %v355 = vsel %vm286, %v300, 0.0
    %v356 = vsel %vm286, %v303, 0.0
    %v357 = vsel %vm286, %v306, 0.0
    %v358 = vsel %vm286, %v309, 0.0
    %v359 = vsel %vm286, %v312, 0.0
    %v360 = vsel %vm286, %v315, 0.0
    %v361 = vsel %vm286, %v318, 0.0
    %v362 = vsel %vm286, %v321, 0.0
    %v363 = vsel %vm286, %v324, 0.0
    %v364 = vsel %vm286, %v327, 0.0
    %v365 = vsel %vm286, %v330, 0.0
    %v366 = vsel %vm286, %v333, 0.0
    %vm367 = vcmask 1043456
    %v368 = vrot.slane %v60, 4
    %v369 = vrot.slane %v61, 4
    %v370 = vsel %vm367, %v368, %v369
    %v371 = vrot.slane %v62, 4
    %v372 = vrot.slane %v63, 4
    %v373 = vsel %vm367, %v371, %v372
    %v374 = vrot.slane %v64, 4
    %v375 = vrot.slane %v65, 4
    %v376 = vsel %vm367, %v374, %v375
    %v377 = vrot.slane %v66, 4
    %v378 = vrot.slane %v67, 4
    %v379 = vsel %vm367, %v377, %v378
    %v380 = vrot.slane %v68, 4
    %v381 = vrot.slane %v69, 4
    %v382 = vsel %vm367, %v380, %v381
    %v383 = vrot.slane %v70, 4
    %v384 = vrot.slane %v71, 4
    %v385 = vsel %vm367, %v383, %v384
    %v386 = vrot.slane %v72, 4
    %v387 = vrot.slane %v73, 4
    %v388 = vsel %vm367, %v386, %v387
    %v389 = vrot.slane %v74, 4
    %v390 = vrot.slane %v75, 4
    %v391 = vsel %vm367, %v389, %v390
    %v392 = vrot.slane %v76, 4
    %v393 = vrot.slane %v77, 4
    %v394 = vsel %vm367, %v392, %v393
    %v395 = vrot.slane %v78, 4
    %v396 = vrot.slane %v79, 4
    %v397 = vsel %vm367, %v395, %v396
    %v398 = vrot.slane %v80, 4
    %v399 = vrot.slane %v81, 4
    %v400 = vsel %vm367, %v398, %v399
    %v401 = vrot.slane %v82, 4
    %v402 = vrot.slane %v83, 4
    %v403 = vsel %vm367, %v401, %v402
    %v404 = vrot.slane %v84, 4
    %v405 = vrot.slane %v85, 4
    %v406 = vsel %vm367, %v404, %v405
    %v407 = vrot.slane %v86, 4
    %v408 = vrot.slane %v87, 4
    %v409 = vsel %vm367, %v407, %v408
    %v410 = vrot.slane %v88, 4
    %v411 = vrot.slane %v89, 4
    %v412 = vsel %vm367, %v410, %v411
    %v413 = vrot.slane %v90, 4
    %v414 = vrot.slane %v91, 4
    %v415 = vsel %vm367, %v413, %v414
    %v448 = vsel %vm367, %v369, 0.0
    %v449 = vsel %vm367, %v372, 0.0
    %v450 = vsel %vm367, %v375, 0.0
    %v451 = vsel %vm367, %v378, 0.0
    %v452 = vsel %vm367, %v381, 0.0
    %v453 = vsel %vm367, %v384, 0.0
    %v454 = vsel %vm367, %v387, 0.0
    %v455 = vsel %vm367, %v390, 0.0
    %v456 = vsel %vm367, %v393, 0.0
    %v457 = vsel %vm367, %v396, 0.0
    %v458 = vsel %vm367, %v399, 0.0
    %v459 = vsel %vm367, %v402, 0.0
    %v460 = vsel %vm367, %v405, 0.0
    %v461 = vsel %vm367, %v408, 0.0
    %v462 = vsel %vm367, %v411, 0.0
    %v463 = vsel %vm367, %v414, 0.0
    %480 = vrot.lane.b32.xlu0 %v127, 32
    %v481 = vpop.permute.xlu0 %480
    %482 = vrot.lane.b32.xlu0 %v189, 32
    %v483 = vpop.permute.xlu0 %482
    %484 = vrot.lane.b32.xlu0 %v130, 32
    %v485 = vpop.permute.xlu0 %484
    %486 = vrot.lane.b32.xlu0 %v190, 32
    %v487 = vpop.permute.xlu0 %486
    %488 = vrot.lane.b32.xlu0 %v133, 32
    %v489 = vpop.permute.xlu0 %488
    %490 = vrot.lane.b32.xlu0 %v191, 32
    %v491 = vpop.permute.xlu0 %490
    %492 = vrot.lane.b32.xlu0 %v136, 32
    %v493 = vpop.permute.xlu0 %492
    %494 = vrot.lane.b32.xlu0 %v192, 32
    %v495 = vpop.permute.xlu0 %494
    %496 = vrot.lane.b32.xlu0 %v139, 32
    %v497 = vpop.permute.xlu0 %496
    %498 = vrot.lane.b32.xlu0 %v193, 32
    %v499 = vpop.permute.xlu0 %498
    %500 = vrot.lane.b32.xlu0 %v142, 32
    %v501 = vpop.permute.xlu0 %500
    %502 = vrot.lane.b32.xlu0 %v194, 32
    %v503 = vpop.permute.xlu0 %502
    %504 = vrot.lane.b32.xlu0 %v145, 32
    %v505 = vpop.permute.xlu0 %504
    %506 = vrot.lane.b32.xlu0 %v195, 32
    %v507 = vpop.permute.xlu0 %506
    %508 = vrot.lane.b32.xlu0 %v148, 32
    %v509 = vpop.permute.xlu0 %508
    %510 = vrot.lane.b32.xlu0 %v196, 32
    %v511 = vpop.permute.xlu0 %510
    %512 = vrot.lane.b32.xlu0 %v151, 32
    %v513 = vpop.permute.xlu0 %512
    %514 = vrot.lane.b32.xlu0 %v197, 32
    %v515 = vpop.permute.xlu0 %514
    %516 = vrot.lane.b32.xlu0 %v154, 32
    %v517 = vpop.permute.xlu0 %516
    %518 = vrot.lane.b32.xlu0 %v198, 32
    %v519 = vpop.permute.xlu0 %518
    %520 = vrot.lane.b32.xlu0 %v157, 32
    %v521 = vpop.permute.xlu0 %520
    %522 = vrot.lane.b32.xlu0 %v199, 32
    %v523 = vpop.permute.xlu0 %522
    %524 = vrot.lane.b32.xlu0 %v160, 32
    %v525 = vpop.permute.xlu0 %524
    %526 = vrot.lane.b32.xlu0 %v200, 32
    %v527 = vpop.permute.xlu0 %526
    %528 = vrot.lane.b32.xlu0 %v163, 32
    %v529 = vpop.permute.xlu0 %528
    %530 = vrot.lane.b32.xlu0 %v201, 32
    %v531 = vpop.permute.xlu0 %530
    %532 = vrot.lane.b32.xlu0 %v166, 32
    %v533 = vpop.permute.xlu0 %532
    %534 = vrot.lane.b32.xlu0 %v202, 32
    %v535 = vpop.permute.xlu0 %534
    %536 = vrot.lane.b32.xlu0 %v169, 32
    %v537 = vpop.permute.xlu0 %536
    %538 = vrot.lane.b32.xlu0 %v203, 32
    %v539 = vpop.permute.xlu0 %538
    %540 = vrot.lane.b32.xlu0 %v172, 32
    %v541 = vpop.permute.xlu0 %540
    %542 = vrot.lane.b32.xlu0 %v204, 32
    %v543 = vpop.permute.xlu0 %542
    %592 = vrot.lane.b32.xlu0 %v208, 64
    %v593 = vpop.permute.xlu0 %592
    %594 = vrot.lane.b32.xlu0 %v270, 64
    %v595 = vpop.permute.xlu0 %594
    %596 = vrot.lane.b32.xlu0 %v211, 64
    %v597 = vpop.permute.xlu0 %596
    %598 = vrot.lane.b32.xlu0 %v271, 64
    %v599 = vpop.permute.xlu0 %598
    %600 = vrot.lane.b32.xlu0 %v214, 64
    %v601 = vpop.permute.xlu0 %600
    %602 = vrot.lane.b32.xlu0 %v272, 64
    %v603 = vpop.permute.xlu0 %602
    %604 = vrot.lane.b32.xlu0 %v217, 64
    %v605 = vpop.permute.xlu0 %604
    %606 = vrot.lane.b32.xlu0 %v273, 64
    %v607 = vpop.permute.xlu0 %606
    %608 = vrot.lane.b32.xlu0 %v220, 64
    %v609 = vpop.permute.xlu0 %608
    %610 = vrot.lane.b32.xlu0 %v274, 64
    %v611 = vpop.permute.xlu0 %610
    %612 = vrot.lane.b32.xlu0 %v223, 64
    %v613 = vpop.permute.xlu0 %612
    %614 = vrot.lane.b32.xlu0 %v275, 64
    %v615 = vpop.permute.xlu0 %614
    %616 = vrot.lane.b32.xlu0 %v226, 64
    %v617 = vpop.permute.xlu0 %616
    %618 = vrot.lane.b32.xlu0 %v276, 64
    %v619 = vpop.permute.xlu0 %618
    %620 = vrot.lane.b32.xlu0 %v229, 64
    %v621 = vpop.permute.xlu0 %620
    %622 = vrot.lane.b32.xlu0 %v277, 64
    %v623 = vpop.permute.xlu0 %622
    %624 = vrot.lane.b32.xlu0 %v232, 64
    %v625 = vpop.permute.xlu0 %624
    %626 = vrot.lane.b32.xlu0 %v278, 64
    %v627 = vpop.permute.xlu0 %626
    %628 = vrot.lane.b32.xlu0 %v235, 64
    %v629 = vpop.permute.xlu0 %628
    %630 = vrot.lane.b32.xlu0 %v279, 64
    %v631 = vpop.permute.xlu0 %630
    %632 = vrot.lane.b32.xlu0 %v238, 64
    %v633 = vpop.permute.xlu0 %632
    %634 = vrot.lane.b32.xlu0 %v280, 64
    %v635 = vpop.permute.xlu0 %634
    %636 = vrot.lane.b32.xlu0 %v241, 64
    %v637 = vpop.permute.xlu0 %636
    %638 = vrot.lane.b32.xlu0 %v281, 64
    %v639 = vpop.permute.xlu0 %638
    %640 = vrot.lane.b32.xlu0 %v244, 64
    %v641 = vpop.permute.xlu0 %640
    %642 = vrot.lane.b32.xlu0 %v282, 64
    %v643 = vpop.permute.xlu0 %642
    %644 = vrot.lane.b32.xlu0 %v247, 64
    %v645 = vpop.permute.xlu0 %644
    %646 = vrot.lane.b32.xlu0 %v283, 64
    %v647 = vpop.permute.xlu0 %646
    %648 = vrot.lane.b32.xlu0 %v250, 64
    %v649 = vpop.permute.xlu0 %648
    %650 = vrot.lane.b32.xlu0 %v284, 64
    %v651 = vpop.permute.xlu0 %650
    %652 = vrot.lane.b32.xlu0 %v253, 64
    %v653 = vpop.permute.xlu0 %652
    %654 = vrot.lane.b32.xlu0 %v285, 64
    %v655 = vpop.permute.xlu0 %654
    %704 = vrot.lane.b32.xlu0 %v289, 96
    %v705 = vpop.permute.xlu0 %704
    %706 = vrot.lane.b32.xlu0 %v351, 96
    %v707 = vpop.permute.xlu0 %706
    %708 = vrot.lane.b32.xlu0 %v292, 96
    %v709 = vpop.permute.xlu0 %708
    %710 = vrot.lane.b32.xlu0 %v352, 96
    %v711 = vpop.permute.xlu0 %710
    %712 = vrot.lane.b32.xlu0 %v295, 96
    %v713 = vpop.permute.xlu0 %712
    %714 = vrot.lane.b32.xlu0 %v353, 96
    %v715 = vpop.permute.xlu0 %714
    %716 = vrot.lane.b32.xlu0 %v298, 96
    %v717 = vpop.permute.xlu0 %716
    %718 = vrot.lane.b32.xlu0 %v354, 96
    %v719 = vpop.permute.xlu0 %718
    %720 = vrot.lane.b32.xlu0 %v301, 96
    %v721 = vpop.permute.xlu0 %720
    %722 = vrot.lane.b32.xlu0 %v355, 96
    %v723 = vpop.permute.xlu0 %722
    %724 = vrot.lane.b32.xlu0 %v304, 96
    %v725 = vpop.permute.xlu0 %724
    %726 = vrot.lane.b32.xlu0 %v356, 96
    %v727 = vpop.permute.xlu0 %726
    %728 = vrot.lane.b32.xlu0 %v307, 96
    %v729 = vpop.permute.xlu0 %728
    %730 = vrot.lane.b32.xlu0 %v357, 96
    %v731 = vpop.permute.xlu0 %730
    %732 = vrot.lane.b32.xlu0 %v310, 96
    %v733 = vpop.permute.xlu0 %732
    %734 = vrot.lane.b32.xlu0 %v358, 96
    %v735 = vpop.permute.xlu0 %734
    %736 = vrot.lane.b32.xlu0 %v313, 96
    %v737 = vpop.permute.xlu0 %736
    %738 = vrot.lane.b32.xlu0 %v359, 96
    %v739 = vpop.permute.xlu0 %738
    %740 = vrot.lane.b32.xlu0 %v316, 96
    %v741 = vpop.permute.xlu0 %740
    %742 = vrot.lane.b32.xlu0 %v360, 96
    %v743 = vpop.permute.xlu0 %742
    %744 = vrot.lane.b32.xlu0 %v319, 96
    %v745 = vpop.permute.xlu0 %744
    %746 = vrot.lane.b32.xlu0 %v361, 96
    %v747 = vpop.permute.xlu0 %746
    %748 = vrot.lane.b32.xlu0 %v322, 96
    %v749 = vpop.permute.xlu0 %748
    %750 = vrot.lane.b32.xlu0 %v362, 96
    %v751 = vpop.permute.xlu0 %750
    %752 = vrot.lane.b32.xlu0 %v325, 96
    %v753 = vpop.permute.xlu0 %752
    %754 = vrot.lane.b32.xlu0 %v363, 96
    %v755 = vpop.permute.xlu0 %754
    %756 = vrot.lane.b32.xlu0 %v328, 96
    %v757 = vpop.permute.xlu0 %756
    %758 = vrot.lane.b32.xlu0 %v364, 96
    %v759 = vpop.permute.xlu0 %758
    %760 = vrot.lane.b32.xlu0 %v331, 96
    %v761 = vpop.permute.xlu0 %760
    %762 = vrot.lane.b32.xlu0 %v365, 96
    %v763 = vpop.permute.xlu0 %762
    %764 = vrot.lane.b32.xlu0 %v334, 96
    %v765 = vpop.permute.xlu0 %764
    %766 = vrot.lane.b32.xlu0 %v366, 96
    %v767 = vpop.permute.xlu0 %766
    %vm800 = vcmask 261120
    %v801 = vsel %vm800, %v60, %v481
    %v802 = vsel %vm800, %v61, %v483
    %v803 = vsel %vm800, %v62, %v485
    %v804 = vsel %vm800, %v63, %v487
    %v805 = vsel %vm800, %v64, %v489
    %v806 = vsel %vm800, %v65, %v491
    %v807 = vsel %vm800, %v66, %v493
    %v808 = vsel %vm800, %v67, %v495
    %v809 = vsel %vm800, %v68, %v497
    %v810 = vsel %vm800, %v69, %v499
    %v811 = vsel %vm800, %v70, %v501
    %v812 = vsel %vm800, %v71, %v503
    %v813 = vsel %vm800, %v72, %v505
    %v814 = vsel %vm800, %v73, %v507
    %v815 = vsel %vm800, %v74, %v509
    %v816 = vsel %vm800, %v75, %v511
    %v817 = vsel %vm800, %v76, %v513
    %v818 = vsel %vm800, %v77, %v515
    %v819 = vsel %vm800, %v78, %v517
    %v820 = vsel %vm800, %v79, %v519
    %v821 = vsel %vm800, %v80, %v521
    %v822 = vsel %vm800, %v81, %v523
    %v823 = vsel %vm800, %v82, %v525
    %v824 = vsel %vm800, %v83, %v527
    %v825 = vsel %vm800, %v84, %v529
    %v826 = vsel %vm800, %v85, %v531
    %v827 = vsel %vm800, %v86, %v533
    %v828 = vsel %vm800, %v87, %v535
    %v829 = vsel %vm800, %v88, %v537
    %v830 = vsel %vm800, %v89, %v539
    %v831 = vsel %vm800, %v90, %v541
    %v832 = vsel %vm800, %v91, %v543
    %vm833 = vcmask 523264
    %v834 = vsel %vm833, %v801, %v593
    %v835 = vsel %vm833, %v802, %v595
    %v836 = vsel %vm833, %v803, %v597
    %v837 = vsel %vm833, %v804, %v599
    %v838 = vsel %vm833, %v805, %v601
    %v839 = vsel %vm833, %v806, %v603
    %v840 = vsel %vm833, %v807, %v605
    %v841 = vsel %vm833, %v808, %v607
    %v842 = vsel %vm833, %v809, %v609
    %v843 = vsel %vm833, %v810, %v611
    %v844 = vsel %vm833, %v811, %v613
    %v845 = vsel %vm833, %v812, %v615
    %v846 = vsel %vm833, %v813, %v617
    %v847 = vsel %vm833, %v814, %v619
    %v848 = vsel %vm833, %v815, %v621
    %v849 = vsel %vm833, %v816, %v623
    %v850 = vsel %vm833, %v817, %v625
    %v851 = vsel %vm833, %v818, %v627
    %v852 = vsel %vm833, %v819, %v629
    %v853 = vsel %vm833, %v820, %v631
    %v854 = vsel %vm833, %v821, %v633
    %v855 = vsel %vm833, %v822, %v635
    %v856 = vsel %vm833, %v823, %v637
    %v857 = vsel %vm833, %v824, %v639
    %v858 = vsel %vm833, %v825, %v641
    %v859 = vsel %vm833, %v826, %v643
    %v860 = vsel %vm833, %v827, %v645
    %v861 = vsel %vm833, %v828, %v647
    %v862 = vsel %vm833, %v829, %v649
    %v863 = vsel %vm833, %v830, %v651
    %v864 = vsel %vm833, %v831, %v653
    %v865 = vsel %vm833, %v832, %v655
    %vm866 = vcmask 785408
    %v867 = vsel %vm866, %v834, %v705
    %v868 = vsel %vm866, %v835, %v707
    %v869 = vsel %vm866, %v836, %v709
    %v870 = vsel %vm866, %v837, %v711
    %v871 = vsel %vm866, %v838, %v713
    %v872 = vsel %vm866, %v839, %v715
    %v873 = vsel %vm866, %v840, %v717
    %v874 = vsel %vm866, %v841, %v719
    %v875 = vsel %vm866, %v842, %v721
    %v876 = vsel %vm866, %v843, %v723
    %v877 = vsel %vm866, %v844, %v725
    %v878 = vsel %vm866, %v845, %v727
    %v879 = vsel %vm866, %v846, %v729
    %v880 = vsel %vm866, %v847, %v731
    %v881 = vsel %vm866, %v848, %v733
    %v882 = vsel %vm866, %v849, %v735
    %v883 = vsel %vm866, %v850, %v737
    %v884 = vsel %vm866, %v851, %v739
    %v885 = vsel %vm866, %v852, %v741
    %v886 = vsel %vm866, %v853, %v743
    %v887 = vsel %vm866, %v854, %v745
    %v888 = vsel %vm866, %v855, %v747
    %v889 = vsel %vm866, %v856, %v749
    %v890 = vsel %vm866, %v857, %v751
    %v891 = vsel %vm866, %v858, %v753
    %v892 = vsel %vm866, %v859, %v755
    %v893 = vsel %vm866, %v860, %v757
    %v894 = vsel %vm866, %v861, %v759
    %v895 = vsel %vm866, %v862, %v761
    %v896 = vsel %vm866, %v863, %v763
    %v897 = vsel %vm866, %v864, %v765
    %v898 = vsel %vm866, %v865, %v767
    %v899 = vpack.c.bf16 %v868, %v867
    %v900 = vpack.c.bf16 %v448, %v370
    %v901 = vpack.c.bf16 %v870, %v869
    %v902 = vpack.c.bf16 %v449, %v373
    %v903 = vpack.c.bf16 %v872, %v871
    %v904 = vpack.c.bf16 %v450, %v376
    %v905 = vpack.c.bf16 %v874, %v873
    %v906 = vpack.c.bf16 %v451, %v379
    %v907 = vpack.c.bf16 %v876, %v875
    %v908 = vpack.c.bf16 %v452, %v382
    %v909 = vpack.c.bf16 %v878, %v877
    %v910 = vpack.c.bf16 %v453, %v385
    %v911 = vpack.c.bf16 %v880, %v879
    %v912 = vpack.c.bf16 %v454, %v388
    %v913 = vpack.c.bf16 %v882, %v881
    %v914 = vpack.c.bf16 %v455, %v391
    %v915 = vpack.c.bf16 %v884, %v883
    %v916 = vpack.c.bf16 %v456, %v394
    %v917 = vpack.c.bf16 %v886, %v885
    %v918 = vpack.c.bf16 %v457, %v397
    %v919 = vpack.c.bf16 %v888, %v887
    %v920 = vpack.c.bf16 %v458, %v400
    %v921 = vpack.c.bf16 %v890, %v889
    %v922 = vpack.c.bf16 %v459, %v403
    %v923 = vpack.c.bf16 %v892, %v891
    %v924 = vpack.c.bf16 %v460, %v406
    %v925 = vpack.c.bf16 %v894, %v893
    %v926 = vpack.c.bf16 %v461, %v409
    %v927 = vpack.c.bf16 %v896, %v895
    %v928 = vpack.c.bf16 %v462, %v412
    %v929 = vpack.c.bf16 %v898, %v897
    %v930 = vpack.c.bf16 %v463, %v415
    %v931 = vld [vmem:[#allocation5] sm:$0xf]
    %v932 = vld [vmem:[#allocation5 + $0x4] sm:$0xf]
    %v933 = vld [vmem:[#allocation5 + $0x8] sm:$0xf]
    %v934 = vld [vmem:[#allocation5 + $0xc] sm:$0xf]
    %v935 = vld [vmem:[#allocation5 + $0x10] sm:$0xf]
    %v936 = vld [vmem:[#allocation5 + $0x14] sm:$0xf]
    %v937 = vld [vmem:[#allocation5 + $0x18] sm:$0xf]
    %v938 = vld [vmem:[#allocation5 + $0x1c] sm:$0xf]
    %v939 = vld [vmem:[#allocation5 + $0x20] sm:$0xf]
    %v940 = vld [vmem:[#allocation5 + $0x24] sm:$0xf]
    %v941 = vld [vmem:[#allocation5 + $0x28] sm:$0xf]
    %v942 = vld [vmem:[#allocation5 + $0x2c] sm:$0xf]
    %v943 = vld [vmem:[#allocation5 + $0x30] sm:$0xf]
    %v944 = vld [vmem:[#allocation5 + $0x34] sm:$0xf]
    %v945 = vld [vmem:[#allocation5 + $0x38] sm:$0xf]
    %v946 = vld [vmem:[#allocation5 + $0x3c] sm:$0xf]
    %v947 = vld [vmem:[#allocation5 + $0x40] sm:$0xf]
    %v948 = vld [vmem:[#allocation5 + $0x44] sm:$0xf]
    %v949 = vld [vmem:[#allocation5 + $0x48] sm:$0xf]
    %v950 = vld [vmem:[#allocation5 + $0x4c] sm:$0xf]
    %v971 = vunpack.c.l.b16 %v931
    %v972 = vunpack.c.l.b16 %v932
    %v973 = vunpack.c.l.b16 %v933
    %v974 = vunpack.c.l.b16 %v934
    %v975 = vunpack.c.l.b16 %v935
    %v976 = vunpack.c.l.b16 %v936
    %v977 = vunpack.c.l.b16 %v937
    %v978 = vunpack.c.l.b16 %v938
    %v979 = vunpack.c.l.b16 %v939
    %v980 = vunpack.c.l.b16 %v940
    %v981 = vunpack.c.l.b16 %v941
    %v982 = vunpack.c.l.b16 %v942
    %v983 = vunpack.c.l.b16 %v943
    %v984 = vunpack.c.l.b16 %v944
    %v985 = vunpack.c.l.b16 %v945
    %v986 = vunpack.c.l.b16 %v946
    %v987 = vunpack.c.l.b16 %v947
    %v988 = vunpack.c.l.b16 %v948
    %v989 = vunpack.c.l.b16 %v949
    %v990 = vunpack.c.l.b16 %v950
    %v991 = vpack.c.b16 %v972, %v971
    %v992 = vpack.c.b16 %v974, %v973
    %v993 = vpack.c.b16 %v976, %v975
    %v994 = vpack.c.b16 %v978, %v977
    %v995 = vpack.c.b16 %v980, %v979
    %v996 = vpack.c.b16 %v982, %v981
    %v997 = vpack.c.b16 %v984, %v983
    %v998 = vpack.c.b16 %v986, %v985
    %v999 = vpack.c.b16 %v988, %v987
    %v1000 = vpack.c.b16 %v990, %v989
    %v1012 = vsel %vm800, %v900, 0
    %v1015 = vsel %vm800, %v902, 0
    %v1018 = vsel %vm800, %v904, 0
    %v1021 = vsel %vm800, %v906, 0
    %v1024 = vsel %vm800, %v908, 0
    %v1027 = vsel %vm800, %v910, 0
    %v1030 = vsel %vm800, %v912, 0
    %v1033 = vsel %vm800, %v914, 0
    %v1036 = vsel %vm800, %v916, 0
    %v1039 = vsel %vm800, %v918, 0
    %v1042 = vsel %vm800, %v920, 0
    %v1045 = vsel %vm800, %v922, 0
    %v1048 = vsel %vm800, %v924, 0
    %v1051 = vsel %vm800, %v926, 0
    %v1054 = vsel %vm800, %v928, 0
    %v1057 = vsel %vm800, %v930, 0
    %1059 = vmatprep.subr.bf16.mxu0 0
    %1060 = vmatpush1.bf16.msra.mxu0 %v991
    %1061 = vmatprep.subr.bf16.mxu0 0
    %1062 = vmatpush1.bf16.msra.mxu0 %v992
    %1063 = vmatprep.subr.bf16.mxu0 0
    %1064 = vmatpush1.bf16.msra.mxu0 %v993
    %1065 = vmatprep.subr.bf16.mxu0 0
    %1066 = vmatpush1.bf16.msra.mxu0 %v994
    %1067 = vmatprep.subr.bf16.mxu0 0
    %1068 = vmatpush1.bf16.msra.mxu0 %v995
    %1069 = vmatprep.subr.bf16.mxu0 0
    %1070 = vmatpush1.bf16.msra.mxu0 %v996
    %1071 = vmatprep.subr.bf16.mxu0 0
    %1072 = vmatpush1.bf16.msra.mxu0 %v997
    %1073 = vmatprep.subr.bf16.mxu0 0
    %1074 = vmatpush1.bf16.msra.mxu0 %v998
    %1075 = vmatprep.subr.bf16.mxu0 0
    %1076 = vmatpush1.bf16.msra.mxu0 %v999
    %1077 = vmatprep.subr.bf16.mxu0 0
    %1078 = vmatpush1.bf16.msra.mxu0 %v1000
    %1079 = vmatprep.subr.bf16.mxu0 0
    %1080 = vmatpush1.bf16.msra.mxu0 0
    %1081 = vmatprep.subr.bf16.mxu0 0
    %1082 = vmatpush1.bf16.msra.mxu0 0
    %1083 = vmatprep.subr.bf16.mxu0 0
    %1084 = vmatpush1.bf16.msra.mxu0 0
    %1085 = vmatprep.subr.bf16.mxu0 0
    %1086 = vmatpush1.bf16.msra.mxu0 0
    %1087 = vmatprep.subr.bf16.mxu0 0
    %1088 = vmatpush1.bf16.msra.mxu0 0
    %1089 = vmatprep.subr.bf16.mxu0 0
    %1090 = vmatpush1.bf16.msra.mxu0 0
    %1091 = vmatprep.mubr.bf16.mxu0 %v1012
    %1092 = vmatmul.mubr.bf16.gmra.mrb[0].mxu0 %v899
    %v1093 = vpop.f32.mrb[0].mxu0
    %v1094 = vadd.f32 0.0, %v1093
    %v1095 = vpop.f32.mrb[0].mxu0
    %v1096 = vpop.f32.mrb[0].mxu0
    %v1097 = vadd.f32 0.0, %v1096
    %v1098 = vpop.f32.mrb[0].mxu0
    %1099 = vmatprep.mubr.bf16.mxu0 %v1015
    %1100 = vmatmul.mubr.bf16.gmra.mrb[0].mxu0 %v901
    %v1101 = vpop.f32.mrb[0].mxu0
    %v1102 = vadd.f32 0.0, %v1101
    %v1103 = vpop.f32.mrb[0].mxu0
    %v1104 = vpop.f32.mrb[0].mxu0
    %v1105 = vadd.f32 0.0, %v1104
    %v1106 = vpop.f32.mrb[0].mxu0
    %1107 = vmatprep.mubr.bf16.mxu0 %v1018
    %1108 = vmatmul.mubr.bf16.gmra.mrb[0].mxu0 %v903
    %v1109 = vpop.f32.mrb[0].mxu0
    %v1110 = vadd.f32 0.0, %v1109
    %v1111 = vpop.f32.mrb[0].mxu0
    %v1112 = vpop.f32.mrb[0].mxu0
    %v1113 = vadd.f32 0.0, %v1112
    %v1114 = vpop.f32.mrb[0].mxu0
    %1115 = vmatprep.mubr.bf16.mxu0 %v1021
    %1116 = vmatmul.mubr.bf16.gmra.mrb[0].mxu0 %v905
    %v1117 = vpop.f32.mrb[0].mxu0
    %v1118 = vadd.f32 0.0, %v1117
    %v1119 = vpop.f32.mrb[0].mxu0
    %v1120 = vpop.f32.mrb[0].mxu0
    %v1121 = vadd.f32 0.0, %v1120
    %v1122 = vpop.f32.mrb[0].mxu0
    %1123 = vmatprep.mubr.bf16.mxu0 %v1024
    %1124 = vmatmul.mubr.bf16.gmra.mrb[0].mxu0 %v907
    %v1125 = vpop.f32.mrb[0].mxu0
    %v1126 = vadd.f32 0.0, %v1125
    %v1127 = vpop.f32.mrb[0].mxu0
    %v1128 = vpop.f32.mrb[0].mxu0
    %v1129 = vadd.f32 0.0, %v1128
    %v1130 = vpop.f32.mrb[0].mxu0
    %1131 = vmatprep.mubr.bf16.mxu0 %v1027
    %1132 = vmatmul.mubr.bf16.gmra.mrb[0].mxu0 %v909
    %v1133 = vpop.f32.mrb[0].mxu0
    %v1134 = vadd.f32 0.0, %v1133
    %v1135 = vpop.f32.mrb[0].mxu0
    %v1136 = vpop.f32.mrb[0].mxu0
    %v1137 = vadd.f32 0.0, %v1136
    %v1138 = vpop.f32.mrb[0].mxu0
    %1139 = vmatprep.mubr.bf16.mxu0 %v1030
    %1140 = vmatmul.mubr.bf16.gmra.mrb[0].mxu0 %v911
    %v1141 = vpop.f32.mrb[0].mxu0
    %v1142 = vadd.f32 0.0, %v1141
    %v1143 = vpop.f32.mrb[0].mxu0
    %v1144 = vpop.f32.mrb[0].mxu0
    %v1145 = vadd.f32 0.0, %v1144
    %v1146 = vpop.f32.mrb[0].mxu0
    %1147 = vmatprep.mubr.bf16.mxu0 %v1033
    %1148 = vmatmul.mubr.bf16.gmra.mrb[0].mxu0 %v913
    %v1149 = vpop.f32.mrb[0].mxu0
    %v1150 = vadd.f32 0.0, %v1149
    %v1151 = vpop.f32.mrb[0].mxu0
    %v1152 = vpop.f32.mrb[0].mxu0
    %v1153 = vadd.f32 0.0, %v1152
    %v1154 = vpop.f32.mrb[0].mxu0
    %1155 = vmatprep.mubr.bf16.mxu0 %v1036
    %1156 = vmatmul.mubr.bf16.gmra.mrb[0].mxu0 %v915
    %v1157 = vpop.f32.mrb[0].mxu0
    %v1158 = vadd.f32 0.0, %v1157
    %v1159 = vpop.f32.mrb[0].mxu0
    %v1160 = vpop.f32.mrb[0].mxu0
    %v1161 = vadd.f32 0.0, %v1160
    %v1162 = vpop.f32.mrb[0].mxu0
    %1163 = vmatprep.mubr.bf16.mxu0 %v1039
    %1164 = vmatmul.mubr.bf16.gmra.mrb[0].mxu0 %v917
    %v1165 = vpop.f32.mrb[0].mxu0
    %v1166 = vadd.f32 0.0, %v1165
    %v1167 = vpop.f32.mrb[0].mxu0
    %v1168 = vpop.f32.mrb[0].mxu0
    %v1169 = vadd.f32 0.0, %v1168
    %v1170 = vpop.f32.mrb[0].mxu0
    %1171 = vmatprep.mubr.bf16.mxu0 %v1042
    %1172 = vmatmul.mubr.bf16.gmra.mrb[0].mxu0 %v919
    %v1173 = vpop.f32.mrb[0].mxu0
    %v1174 = vadd.f32 0.0, %v1173
    %v1175 = vpop.f32.mrb[0].mxu0
    %v1176 = vpop.f32.mrb[0].mxu0
    %v1177 = vadd.f32 0.0, %v1176
    %v1178 = vpop.f32.mrb[0].mxu0
    %1179 = vmatprep.mubr.bf16.mxu0 %v1045
    %1180 = vmatmul.mubr.bf16.gmra.mrb[0].mxu0 %v921
    %v1181 = vpop.f32.mrb[0].mxu0
    %v1182 = vadd.f32 0.0, %v1181
    %v1183 = vpop.f32.mrb[0].mxu0
    %v1184 = vpop.f32.mrb[0].mxu0
    %v1185 = vadd.f32 0.0, %v1184
    %v1186 = vpop.f32.mrb[0].mxu0
    %1187 = vmatprep.mubr.bf16.mxu0 %v1048
    %1188 = vmatmul.mubr.bf16.gmra.mrb[0].mxu0 %v923
    %v1189 = vpop.f32.mrb[0].mxu0
    %v1190 = vadd.f32 0.0, %v1189
    %v1191 = vpop.f32.mrb[0].mxu0
    %v1192 = vpop.f32.mrb[0].mxu0
    %v1193 = vadd.f32 0.0, %v1192
    %v1194 = vpop.f32.mrb[0].mxu0
    %1195 = vmatprep.mubr.bf16.mxu0 %v1051
    %1196 = vmatmul.mubr.bf16.gmra.mrb[0].mxu0 %v925
    %v1197 = vpop.f32.mrb[0].mxu0
    %v1198 = vadd.f32 0.0, %v1197
    %v1199 = vpop.f32.mrb[0].mxu0
    %v1200 = vpop.f32.mrb[0].mxu0
    %v1201 = vadd.f32 0.0, %v1200
    %v1202 = vpop.f32.mrb[0].mxu0
    %1203 = vmatprep.mubr.bf16.mxu0 %v1054
    %1204 = vmatmul.mubr.bf16.gmra.mrb[0].mxu0 %v927
    %v1205 = vpop.f32.mrb[0].mxu0
    %v1206 = vadd.f32 0.0, %v1205
    %v1207 = vpop.f32.mrb[0].mxu0
    %v1208 = vpop.f32.mrb[0].mxu0
    %v1209 = vadd.f32 0.0, %v1208
    %v1210 = vpop.f32.mrb[0].mxu0
    %1211 = vmatprep.mubr.bf16.mxu0 %v1057
    %1212 = vmatmul.mubr.bf16.gmra.mrb[0].mxu0 %v929
    %v1213 = vpop.f32.mrb[0].mxu0
    %v1214 = vadd.f32 0.0, %v1213
    %v1215 = vpop.f32.mrb[0].mxu0
    %v1216 = vpop.f32.mrb[0].mxu0
    %v1217 = vadd.f32 0.0, %v1216
    %v1218 = vpop.f32.mrb[0].mxu0
    %1219 = vdwg.mxu0
    %v1220 = vld [vmem:[%s2] sm:$0x1]
    %v1222 = vlaneseq
    %v1223 = vshrl.u32 %v1222, 7
    %v1224 = vsub.s32 0, %v1223
    %v1225 = vrot.slane %v1220, %v1224
    %v1227 = vadd.f32 %v1094, %v1225
    %v1228 = vadd.f32 %v1097, %v1225
    %v1229 = vadd.f32 %v1102, %v1225
    %v1230 = vadd.f32 %v1105, %v1225
    %v1231 = vadd.f32 %v1110, %v1225
    %v1232 = vadd.f32 %v1113, %v1225
    %v1233 = vadd.f32 %v1118, %v1225
    %v1234 = vadd.f32 %v1121, %v1225
    %v1235 = vadd.f32 %v1126, %v1225
    %v1236 = vadd.f32 %v1129, %v1225
    %v1237 = vadd.f32 %v1134, %v1225
    %v1238 = vadd.f32 %v1137, %v1225
    %v1239 = vadd.f32 %v1142, %v1225
    %v1240 = vadd.f32 %v1145, %v1225
    %v1241 = vadd.f32 %v1150, %v1225
    %v1242 = vadd.f32 %v1153, %v1225
    %v1243 = vadd.f32 %v1158, %v1225
    %v1244 = vadd.f32 %v1161, %v1225
    %v1245 = vadd.f32 %v1166, %v1225
    %v1246 = vadd.f32 %v1169, %v1225
    %v1247 = vadd.f32 %v1174, %v1225
    %v1248 = vadd.f32 %v1177, %v1225
    %v1249 = vadd.f32 %v1182, %v1225
    %v1250 = vadd.f32 %v1185, %v1225
    %v1251 = vadd.f32 %v1190, %v1225
    %v1252 = vadd.f32 %v1193, %v1225
    %v1253 = vadd.f32 %v1198, %v1225
    %v1254 = vadd.f32 %v1201, %v1225
    %v1255 = vadd.f32 %v1206, %v1225
    %v1256 = vadd.f32 %v1209, %v1225
    %v1257 = vadd.f32 %v1214, %v1225
    %v1258 = vadd.f32 %v1217, %v1225
    %v1259 = vmax.f32 %v1227, 0.0
    %v1260 = vmax.f32 %v1228, 0.0
    %v1261 = vmax.f32 %v1229, 0.0
    %v1262 = vmax.f32 %v1230, 0.0
    %v1263 = vmax.f32 %v1231, 0.0
    %v1264 = vmax.f32 %v1232, 0.0
    %v1265 = vmax.f32 %v1233, 0.0
    %v1266 = vmax.f32 %v1234, 0.0
    %v1267 = vmax.f32 %v1235, 0.0
    %v1268 = vmax.f32 %v1236, 0.0
    %v1269 = vmax.f32 %v1237, 0.0
    %v1270 = vmax.f32 %v1238, 0.0
    %v1271 = vmax.f32 %v1239, 0.0
    %v1272 = vmax.f32 %v1240, 0.0
    %v1273 = vmax.f32 %v1241, 0.0
    %v1274 = vmax.f32 %v1242, 0.0
    %v1275 = vmax.f32 %v1243, 0.0
    %v1276 = vmax.f32 %v1244, 0.0
    %v1277 = vmax.f32 %v1245, 0.0
    %v1278 = vmax.f32 %v1246, 0.0
    %v1279 = vmax.f32 %v1247, 0.0
    %v1280 = vmax.f32 %v1248, 0.0
    %v1281 = vmax.f32 %v1249, 0.0
    %v1282 = vmax.f32 %v1250, 0.0
    %v1283 = vmax.f32 %v1251, 0.0
    %v1284 = vmax.f32 %v1252, 0.0
    %v1285 = vmax.f32 %v1253, 0.0
    %v1286 = vmax.f32 %v1254, 0.0
    %v1287 = vmax.f32 %v1255, 0.0
    %v1288 = vmax.f32 %v1256, 0.0
    %v1289 = vmax.f32 %v1257, 0.0
    %v1290 = vmax.f32 %v1258, 0.0
    %v1291 = vld [vmem:[#allocation7] sm:$0xff]
    %v1292 = vld [vmem:[#allocation7 + $0x8] sm:$0xff]
    %v1293 = vmul.f32 %v1259, %v1291
    %v1294 = vmul.f32 %v1260, %v1292
    %v1295 = vmul.f32 %v1261, %v1291
    %v1296 = vmul.f32 %v1262, %v1292
    %v1297 = vmul.f32 %v1263, %v1291
    %v1298 = vmul.f32 %v1264, %v1292
    %v1299 = vmul.f32 %v1265, %v1291
    %v1300 = vmul.f32 %v1266, %v1292
    %v1301 = vmul.f32 %v1267, %v1291
    %v1302 = vmul.f32 %v1268, %v1292
    %v1303 = vmul.f32 %v1269, %v1291
    %v1304 = vmul.f32 %v1270, %v1292
    %v1305 = vmul.f32 %v1271, %v1291
    %v1306 = vmul.f32 %v1272, %v1292
    %v1307 = vmul.f32 %v1273, %v1291
    %v1308 = vmul.f32 %v1274, %v1292
    %v1309 = vmul.f32 %v1275, %v1291
    %v1310 = vmul.f32 %v1276, %v1292
    %v1311 = vmul.f32 %v1277, %v1291
    %v1312 = vmul.f32 %v1278, %v1292
    %v1313 = vmul.f32 %v1279, %v1291
    %v1314 = vmul.f32 %v1280, %v1292
    %v1315 = vmul.f32 %v1281, %v1291
    %v1316 = vmul.f32 %v1282, %v1292
    %v1317 = vmul.f32 %v1283, %v1291
    %v1318 = vmul.f32 %v1284, %v1292
    %v1319 = vmul.f32 %v1285, %v1291
    %v1320 = vmul.f32 %v1286, %v1292
    %v1321 = vmul.f32 %v1287, %v1291
    %v1322 = vmul.f32 %v1288, %v1292
    %v1323 = vmul.f32 %v1289, %v1291
    %v1324 = vmul.f32 %v1290, %v1292
    %v1325 = vmax.f32 %v1293, %v1294
    %v1326 = vrot.slane %v1325, 4
    %v1327 = vmax.f32 %v1325, %v1326
    %v1328 = vrot.slane %v1327, 2
    %v1329 = vmax.f32 %v1327, %v1328
    %v1330 = vrot.slane %v1329, 1
    %v1331 = vmax.f32 %v1329, %v1330
    %v1332 = vmax.f32 %v1295, %v1296
    %v1333 = vrot.slane %v1332, 4
    %v1334 = vmax.f32 %v1332, %v1333
    %v1335 = vrot.slane %v1334, 2
    %v1336 = vmax.f32 %v1334, %v1335
    %v1337 = vrot.slane %v1336, 1
    %v1338 = vmax.f32 %v1336, %v1337
    %v1339 = vmax.f32 %v1297, %v1298
    %v1340 = vrot.slane %v1339, 4
    %v1341 = vmax.f32 %v1339, %v1340
    %v1342 = vrot.slane %v1341, 2
    %v1343 = vmax.f32 %v1341, %v1342
    %v1344 = vrot.slane %v1343, 1
    %v1345 = vmax.f32 %v1343, %v1344
    %v1346 = vmax.f32 %v1299, %v1300
    %v1347 = vrot.slane %v1346, 4
    %v1348 = vmax.f32 %v1346, %v1347
    %v1349 = vrot.slane %v1348, 2
    %v1350 = vmax.f32 %v1348, %v1349
    %v1351 = vrot.slane %v1350, 1
    %v1352 = vmax.f32 %v1350, %v1351
    %v1353 = vmax.f32 %v1301, %v1302
    %v1354 = vrot.slane %v1353, 4
    %v1355 = vmax.f32 %v1353, %v1354
    %v1356 = vrot.slane %v1355, 2
    %v1357 = vmax.f32 %v1355, %v1356
    %v1358 = vrot.slane %v1357, 1
    %v1359 = vmax.f32 %v1357, %v1358
    %v1360 = vmax.f32 %v1303, %v1304
    %v1361 = vrot.slane %v1360, 4
    %v1362 = vmax.f32 %v1360, %v1361
    %v1363 = vrot.slane %v1362, 2
    %v1364 = vmax.f32 %v1362, %v1363
    %v1365 = vrot.slane %v1364, 1
    %v1366 = vmax.f32 %v1364, %v1365
    %v1367 = vmax.f32 %v1305, %v1306
    %v1368 = vrot.slane %v1367, 4
    %v1369 = vmax.f32 %v1367, %v1368
    %v1370 = vrot.slane %v1369, 2
    %v1371 = vmax.f32 %v1369, %v1370
    %v1372 = vrot.slane %v1371, 1
    %v1373 = vmax.f32 %v1371, %v1372
    %v1374 = vmax.f32 %v1307, %v1308
    %v1375 = vrot.slane %v1374, 4
    %v1376 = vmax.f32 %v1374, %v1375
    %v1377 = vrot.slane %v1376, 2
    %v1378 = vmax.f32 %v1376, %v1377
    %v1379 = vrot.slane %v1378, 1
    %v1380 = vmax.f32 %v1378, %v1379
    %v1381 = vmax.f32 %v1309, %v1310
    %v1382 = vrot.slane %v1381, 4
    %v1383 = vmax.f32 %v1381, %v1382
    %v1384 = vrot.slane %v1383, 2
    %v1385 = vmax.f32 %v1383, %v1384
    %v1386 = vrot.slane %v1385, 1
    %v1387 = vmax.f32 %v1385, %v1386
    %v1388 = vmax.f32 %v1311, %v1312
    %v1389 = vrot.slane %v1388, 4
    %v1390 = vmax.f32 %v1388, %v1389
    %v1391 = vrot.slane %v1390, 2
    %v1392 = vmax.f32 %v1390, %v1391
    %v1393 = vrot.slane %v1392, 1
    %v1394 = vmax.f32 %v1392, %v1393
    %v1395 = vmax.f32 %v1313, %v1314
    %v1396 = vrot.slane %v1395, 4
    %v1397 = vmax.f32 %v1395, %v1396
    %v1398 = vrot.slane %v1397, 2
    %v1399 = vmax.f32 %v1397, %v1398
    %v1400 = vrot.slane %v1399, 1
    %v1401 = vmax.f32 %v1399, %v1400
    %v1402 = vmax.f32 %v1315, %v1316
    %v1403 = vrot.slane %v1402, 4
    %v1404 = vmax.f32 %v1402, %v1403
    %v1405 = vrot.slane %v1404, 2
    %v1406 = vmax.f32 %v1404, %v1405
    %v1407 = vrot.slane %v1406, 1
    %v1408 = vmax.f32 %v1406, %v1407
    %v1409 = vmax.f32 %v1317, %v1318
    %v1410 = vrot.slane %v1409, 4
    %v1411 = vmax.f32 %v1409, %v1410
    %v1412 = vrot.slane %v1411, 2
    %v1413 = vmax.f32 %v1411, %v1412
    %v1414 = vrot.slane %v1413, 1
    %v1415 = vmax.f32 %v1413, %v1414
    %v1416 = vmax.f32 %v1319, %v1320
    %v1417 = vrot.slane %v1416, 4
    %v1418 = vmax.f32 %v1416, %v1417
    %v1419 = vrot.slane %v1418, 2
    %v1420 = vmax.f32 %v1418, %v1419
    %v1421 = vrot.slane %v1420, 1
    %v1422 = vmax.f32 %v1420, %v1421
    %v1423 = vmax.f32 %v1321, %v1322
    %v1424 = vrot.slane %v1423, 4
    %v1425 = vmax.f32 %v1423, %v1424
    %v1426 = vrot.slane %v1425, 2
    %v1427 = vmax.f32 %v1425, %v1426
    %v1428 = vrot.slane %v1427, 1
    %v1429 = vmax.f32 %v1427, %v1428
    %v1430 = vmax.f32 %v1323, %v1324
    %v1431 = vrot.slane %v1430, 4
    %v1432 = vmax.f32 %v1430, %v1431
    %v1433 = vrot.slane %v1432, 2
    %v1434 = vmax.f32 %v1432, %v1433
    %v1435 = vrot.slane %v1434, 1
    %v1436 = vmax.f32 %v1434, %v1435
    %vm1453 = vcmask 1041409
    %v1454 = vsel %vm1453, %v1338, %v1331
    %vm1455 = vcmask 1042434
    %v1456 = vsel %vm1455, %v1345, %v1454
    %vm1457 = vcmask 1043459
    %v1458 = vsel %vm1457, %v1352, %v1456
    %vm1459 = vcmask 1044484
    %v1460 = vsel %vm1459, %v1359, %v1458
    %vm1461 = vcmask 1045509
    %v1462 = vsel %vm1461, %v1366, %v1460
    %vm1463 = vcmask 1046534
    %v1464 = vsel %vm1463, %v1373, %v1462
    %vm1465 = vcmask 1047559
    %v1466 = vsel %vm1465, %v1380, %v1464
    %v1467 = vsel %vm1453, %v1394, %v1387
    %v1468 = vsel %vm1455, %v1401, %v1467
    %v1469 = vsel %vm1457, %v1408, %v1468
    %v1470 = vsel %vm1459, %v1415, %v1469
    %v1471 = vsel %vm1461, %v1422, %v1470
    %v1472 = vsel %vm1463, %v1429, %v1471
    %v1473 = vsel %vm1465, %v1436, %v1472
    %1476 = vst [vmem:[#allocation8] sm:$0xff] %v1466
    %1477 = vst [vmem:[#allocation8 + $0x8] sm:$0xff] %v1473
    // Predicated region
    $region30: #{_forward_impl.1} parent=1 // pred_check
      _
    $region31: #{_forward_impl.1} parent=1 // pred_check_branch
      %1479 = sbr.rel (0) target = $region33
    $region32: #{_forward_impl.1} parent=1 // pred_region
      %s1481 = ssub.s32 256, 256
      %1482 = vsyncadd [#allocation4], %s1481
      %s1483 = sshll.u32 [#allocation8], 4
      %s1484 = int_to_ptr.vmem [resolvable:$true] %s1483
      %1489 = dma.vmem_to_hbm [thread:$0]  %s1484, 256, %s4, [#allocation4], 128, 128, 8
    $region33: #{_forward_impl.1} parent=1 // pred_fallthru
      _
    // Predicated region
    $region34: #{_forward_impl.1} parent=1 // pred_check
      _
    $region35: #{_forward_impl.1} parent=1 // pred_check_branch
      %1491 = sbr.rel (0) target = $region37
    $region36: #{_forward_impl.1} parent=1 // pred_region
      %1492 = dma.done [#allocation4], 256
    $region37: #{_forward_impl.1} parent=1 // pred_fallthru
      _
    %1493 = vsyncpa [#allocation3], 1
    %1494 = vsyncpa [#allocation6], 1
    %1495 = vsyncpa [#allocation4], 1

</llo_original>
